<compile_context>
chip_gen: v5e
topology: v5e:2x2
jax: 0.10.0
libtpu: 0.0.40
codegen_flags: <defaults>
</compile_context>

<pallas_src>
import functools

import jax
import jax.numpy as jnp
from jax import lax
from jax.experimental import pallas as pl
from jax.experimental.pallas import tpu as pltpu


def _round_up(x, m):
    return ((x + m - 1) // m) * m


def _round_down(x, m):
    return (x // m) * m


def _sublane_pack(itemsize):
    # Sublane packing factor: 8 for f32, 16 for bf16, 32 for int8/fp8.
    return max(8, 32 // max(1, itemsize))


def _vmem_capacity_bytes():
    try:
        info = pltpu.get_tpu_info()
        cap = getattr(info, "vmem_capacity_bytes", None)
        if cap:
            return int(cap)
    except Exception:
        pass
    return 64 * 1024 * 1024  # conservative: assume v7x-style 64 MiB per TC


def _vmem_limit_and_budget():
    cap = _vmem_capacity_bytes()
    if cap >= 128 * 1024 * 1024:
        # v5e / v6e (128 MiB physical): generous limit, MiB-scale tiles.
        return 64 * 1024 * 1024, 28 * 1024 * 1024
    # v7x (64 MiB per TC): ~1-4 MiB double-buffered tiles, plenty of headroom.
    return 32 * 1024 * 1024, 10 * 1024 * 1024


def _chan_ln_kernel_3d(x_ref, g_ref, b_ref, o_ref, *, eps, inv_c):
    # x_ref: (1, C, hw_tile) with C on sublanes; g_ref / b_ref: (1, C, 1).
    xf = x_ref[...].astype(jnp.float32)
    mean = jnp.sum(xf, axis=1, keepdims=True) * inv_c          # (1,1,hw_tile)
    centered = xf - mean
    # Two-pass variance (matches torch.var(unbiased=False) numerics).
    var = jnp.sum(centered * centered, axis=1, keepdims=True) * inv_c
    inv_std = lax.rsqrt(var + eps)                              # EUP rsqrt
    g = g_ref[...].astype(jnp.float32)
    b = b_ref[...].astype(jnp.float32)
    o_ref[...] = (centered * inv_std * g + b).astype(o_ref.dtype)


def _chan_ln_kernel_4d(x_ref, g_ref, b_ref, o_ref, *, eps, inv_c):
    # x_ref: (1, C, s_tile, 128); g_ref / b_ref: (1, C, 1, 1).
    # Each channel is a full (s_tile, 128) plane of vregs, so the channel
    # reduction is C-1 plain VPU adds — no XLU, no sublane-padding waste.
    xf = x_ref[...].astype(jnp.float32)
    C = xf.shape[1]
    acc = xf[:, 0:1]
    for c in range(1, C):
        acc = acc + xf[:, c:c + 1]
    mean = acc * inv_c                                          # (1,1,s,128)
    centered = xf - mean
    acc2 = centered[:, 0:1] * centered[:, 0:1]
    for c in range(1, C):
        acc2 = acc2 + centered[:, c:c + 1] * centered[:, c:c + 1]
    var = acc2 * inv_c
    inv_std = lax.rsqrt(var + eps)                              # EUP rsqrt
    g = g_ref[...].astype(jnp.float32)
    b = b_ref[...].astype(jnp.float32)
    o_ref[...] = (centered * inv_std * g + b).astype(o_ref.dtype)


def chan_layer_norm(x, g, b, *, eps=1e-05, hw_tile=None):
    """x: (N, C, H, W) like the PyTorch module; g, b: (1, C, 1, 1)."""
    N, C, H, W = x.shape
    HW = H * W
    io_itemsize = jnp.dtype(x.dtype).itemsize

    vmem_limit, vmem_budget = _vmem_limit_and_budget()
    # Per element of a block: double-buffered in + out (io dtype) + f32 temps.
    bytes_per_elem = 4 * io_itemsize + 4 * 4

    param_itemsize = jnp.dtype(g.dtype).itemsize
    cost = pl.CostEstimate(
        flops=8 * N * C * HW,
        transcendentals=N * HW,
        bytes_accessed=2 * N * C * HW * io_itemsize + 2 * C * param_itemsize,
    )
    compiler_params = pltpu.CompilerParams(
        dimension_semantics=("parallel", "parallel"),
        vmem_limit_bytes=vmem_limit,
    )

    # ---- Preferred 4-D layout: zero sublane-padding waste for tiny/odd C ----
    use_4d = (hw_tile is None) and (HW % 128 == 0) and (C <= 128)
    if use_4d:
        S = HW // 128
        bytes_per_srow = C * 128 * bytes_per_elem
        # Minimal block is 8 sublane-rows per channel (or S if smaller, which
        # still occupies 8 padded rows) — fall back to 3-D if even that is big.
        if 8 * bytes_per_srow > vmem_budget:
            use_4d = False

    if use_4d:
        S = HW // 128
        bytes_per_srow = C * 128 * bytes_per_elem
        max_s = max(8, vmem_budget // bytes_per_srow)
        s_tile = S if S <= max_s else max(8, _round_down(max_s, 8))
        # v7x megacore: make sure both TensorCores get work (>= 2 grid steps).
        if N * pl.cdiv(S, s_tile) < 2 and S > 8:
            s_tile = max(8, _round_up(pl.cdiv(S, 2), 8))

        x4 = x.reshape(N, C, S, 128)
        g4 = g.reshape(1, C, 1, 1)
        b4 = b.reshape(1, C, 1, 1)
        grid = (N, pl.cdiv(S, s_tile))

        out4 = pl.pallas_call(
            functools.partial(_chan_ln_kernel_4d, eps=float(eps), inv_c=1.0 / C),
            out_shape=jax.ShapeDtypeStruct((N, C, S, 128), x.dtype),
            grid_spec=pltpu.PrefetchScalarGridSpec(
                num_scalar_prefetch=0,
                grid=grid,
                in_specs=[
                    pl.BlockSpec((1, C, s_tile, 128), lambda n, t: (n, 0, t, 0)),
                    pl.BlockSpec((1, C, 1, 1), lambda n, t: (0, 0, 0, 0)),
                    pl.BlockSpec((1, C, 1, 1), lambda n, t: (0, 0, 0, 0)),
                ],
                out_specs=pl.BlockSpec((1, C, s_tile, 128), lambda n, t: (n, 0, t, 0)),
            ),
            compiler_params=compiler_params,
            cost_estimate=cost,
        )(x4, g4, b4)
        return out4.reshape(N, C, H, W)

    # ---- 3-D fallback: (N, C, HW) with C on sublanes ----
    x3 = x.reshape(N, C, HW)
    g3 = g.reshape(1, C, 1)
    b3 = b.reshape(1, C, 1)

    # Padding-aware sizing: C occupies round_up(C, pack) sublanes in VMEM.
    c_padded = _round_up(C, _sublane_pack(io_itemsize))
    bytes_per_lane = c_padded * bytes_per_elem

    user_tile = hw_tile is not None
    if not user_tile:
        max_lanes = max(128, vmem_budget // bytes_per_lane)
        hw_tile = HW if HW <= max_lanes else _round_down(max_lanes, 128)
    else:
        # Validate/round a caller-supplied tile: multiple of 128 or full HW.
        hw_tile = min(int(hw_tile), HW)
        if hw_tile < HW:
            hw_tile = max(128, _round_down(hw_tile, 128))

    # v7x megacore: make sure both TensorCores get work (>= 2 grid steps).
    if (not user_tile) and N * pl.cdiv(HW, hw_tile) < 2 and HW > 128:
        hw_tile = max(128, _round_up(pl.cdiv(HW, 2), 128))

    grid = (N, pl.cdiv(HW, hw_tile))

    out3 = pl.pallas_call(
        functools.partial(_chan_ln_kernel_3d, eps=float(eps), inv_c=1.0 / C),
        out_shape=jax.ShapeDtypeStruct((N, C, HW), x.dtype),
        grid_spec=pltpu.PrefetchScalarGridSpec(
            num_scalar_prefetch=0,
            grid=grid,
            in_specs=[
                pl.BlockSpec((1, C, hw_tile), lambda n, t: (n, 0, t)),
                pl.BlockSpec((1, C, 1), lambda n, t: (0, 0, 0)),
                pl.BlockSpec((1, C, 1), lambda n, t: (0, 0, 0)),
            ],
            out_specs=pl.BlockSpec((1, C, hw_tile), lambda n, t: (n, 0, t)),
        ),
        compiler_params=compiler_params,
        cost_estimate=cost,
    )(x3, g3, b3)
    return out3.reshape(N, C, H, W)


def chan_layer_norm_ref(x, g, b, eps=1e-05):
    mean = jnp.mean(x, axis=1, keepdims=True)
    var = jnp.mean((x - mean) ** 2, axis=1, keepdims=True)
    return (x - mean) / jnp.sqrt(var + eps) * g + b


if __name__ == "__main__":
    key = jax.random.PRNGKey(0)
    N, C, H, W = 2, 4, 16, 16

    x = jax.random.normal(key, (N, C, H, W), dtype=jnp.float32)
    # Deterministic parameter init matching nn.Parameter(ones)/nn.Parameter(zeros).
    g = jnp.ones((1, C, 1, 1), dtype=jnp.float32)
    b = jnp.zeros((1, C, 1, 1), dtype=jnp.float32)

    ref = chan_layer_norm_ref(x, g, b)

    # Preferred 4-D lane-dense layout (HW % 128 == 0, tiny C).
    out = chan_layer_norm(x, g, b)
    out = jax.block_until_ready(out)
    assert out.shape == (N, C, H, W)
    assert jnp.allclose(out, ref, atol=1e-5, rtol=1e-5)

    # 3-D fallback path (exercised via an explicit hw_tile).
    out3d = chan_layer_norm(x, g, b, hw_tile=128)
    out3d = jax.block_until_ready(out3d)
    assert jnp.allclose(out3d, ref, atol=1e-5, rtol=1e-5)

    print("KERNEL_OK")
</pallas_src>

<mosaic_0001>
module attributes {stable_mosaic.version = 11 : i64} {
  func.func @_chan_ln_kernel_4d(%arg0: i32, %arg1: i32, %arg2: memref<1x4x2x128xf32, #tpu.memory_space<vmem>>, %arg3: memref<1x4x1x1xf32, #tpu.memory_space<vmem>>, %arg4: memref<1x4x1x1xf32, #tpu.memory_space<vmem>>, %arg5: memref<1x4x2x128xf32, #tpu.memory_space<vmem>>) attributes {dimension_semantics = [#tpu.dimension_semantics<parallel>, #tpu.dimension_semantics<parallel>], iteration_bounds = array<i64: 2, 1>, scalar_prefetch = 0 : i64, scratch_operands = 0 : i64, tpu.core_type = #tpu.core_type<tc>, window_params = [{transform_indices = @transform_0, window_bounds = array<i64: 1, 4, 2, 128>}, {pipeline_mode = #tpu.pipeline_mode<synchronous>, transform_indices = @transform_1, window_bounds = array<i64: 1, 4, 1, 1>}, {pipeline_mode = #tpu.pipeline_mode<synchronous>, transform_indices = @transform_2, window_bounds = array<i64: 1, 4, 1, 1>}, {transform_indices = @transform_3, window_bounds = array<i64: 1, 4, 2, 128>}]} {
    %c0 = arith.constant 0 : index
    %c0_0 = arith.constant 0 : index
    %c0_1 = arith.constant 0 : index
    %c0_2 = arith.constant 0 : index
    %0 = vector.load %arg2[%c0, %c0_0, %c0_1, %c0_2] : memref<1x4x2x128xf32, #tpu.memory_space<vmem>>, vector<1x4x2x128xf32>
    %1 = vector.extract_strided_slice %0 {offsets = [0, 0, 0, 0], sizes = [1, 1, 2, 128], strides = [1, 1, 1, 1]} : vector<1x4x2x128xf32> to vector<1x1x2x128xf32>
    %2 = vector.extract_strided_slice %0 {offsets = [0, 1, 0, 0], sizes = [1, 1, 2, 128], strides = [1, 1, 1, 1]} : vector<1x4x2x128xf32> to vector<1x1x2x128xf32>
    %3 = arith.addf %1, %2 : vector<1x1x2x128xf32>
    %4 = vector.extract_strided_slice %0 {offsets = [0, 2, 0, 0], sizes = [1, 1, 2, 128], strides = [1, 1, 1, 1]} : vector<1x4x2x128xf32> to vector<1x1x2x128xf32>
    %5 = arith.addf %3, %4 : vector<1x1x2x128xf32>
    %6 = vector.extract_strided_slice %0 {offsets = [0, 3, 0, 0], sizes = [1, 1, 2, 128], strides = [1, 1, 1, 1]} : vector<1x4x2x128xf32> to vector<1x1x2x128xf32>
    %7 = arith.addf %5, %6 : vector<1x1x2x128xf32>
    %cst = arith.constant 2.500000e-01 : f32
    %8 = vector.broadcast %cst : f32 to vector<1x1x2x128xf32>
    %9 = arith.mulf %7, %8 : vector<1x1x2x128xf32>
    %10 = vector.broadcast %9 : vector<1x1x2x128xf32> to vector<1x4x2x128xf32>
    %11 = arith.subf %0, %10 : vector<1x4x2x128xf32>
    %12 = vector.extract_strided_slice %11 {offsets = [0, 0, 0, 0], sizes = [1, 1, 2, 128], strides = [1, 1, 1, 1]} : vector<1x4x2x128xf32> to vector<1x1x2x128xf32>
    %13 = vector.extract_strided_slice %11 {offsets = [0, 0, 0, 0], sizes = [1, 1, 2, 128], strides = [1, 1, 1, 1]} : vector<1x4x2x128xf32> to vector<1x1x2x128xf32>
    %14 = arith.mulf %12, %13 : vector<1x1x2x128xf32>
    %15 = vector.extract_strided_slice %11 {offsets = [0, 1, 0, 0], sizes = [1, 1, 2, 128], strides = [1, 1, 1, 1]} : vector<1x4x2x128xf32> to vector<1x1x2x128xf32>
    %16 = vector.extract_strided_slice %11 {offsets = [0, 1, 0, 0], sizes = [1, 1, 2, 128], strides = [1, 1, 1, 1]} : vector<1x4x2x128xf32> to vector<1x1x2x128xf32>
    %17 = arith.mulf %15, %16 : vector<1x1x2x128xf32>
    %18 = arith.addf %14, %17 : vector<1x1x2x128xf32>
    %19 = vector.extract_strided_slice %11 {offsets = [0, 2, 0, 0], sizes = [1, 1, 2, 128], strides = [1, 1, 1, 1]} : vector<1x4x2x128xf32> to vector<1x1x2x128xf32>
    %20 = vector.extract_strided_slice %11 {offsets = [0, 2, 0, 0], sizes = [1, 1, 2, 128], strides = [1, 1, 1, 1]} : vector<1x4x2x128xf32> to vector<1x1x2x128xf32>
    %21 = arith.mulf %19, %20 : vector<1x1x2x128xf32>
    %22 = arith.addf %18, %21 : vector<1x1x2x128xf32>
    %23 = vector.extract_strided_slice %11 {offsets = [0, 3, 0, 0], sizes = [1, 1, 2, 128], strides = [1, 1, 1, 1]} : vector<1x4x2x128xf32> to vector<1x1x2x128xf32>
    %24 = vector.extract_strided_slice %11 {offsets = [0, 3, 0, 0], sizes = [1, 1, 2, 128], strides = [1, 1, 1, 1]} : vector<1x4x2x128xf32> to vector<1x1x2x128xf32>
    %25 = arith.mulf %23, %24 : vector<1x1x2x128xf32>
    %26 = arith.addf %22, %25 : vector<1x1x2x128xf32>
    %cst_3 = arith.constant 2.500000e-01 : f32
    %27 = vector.broadcast %cst_3 : f32 to vector<1x1x2x128xf32>
    %28 = arith.mulf %26, %27 : vector<1x1x2x128xf32>
    %cst_4 = arith.constant 9.99999974E-6 : f32
    %29 = vector.broadcast %cst_4 : f32 to vector<1x1x2x128xf32>
    %30 = arith.addf %28, %29 : vector<1x1x2x128xf32>
    %31 = math.rsqrt %30 : vector<1x1x2x128xf32>
    %c0_5 = arith.constant 0 : index
    %c0_6 = arith.constant 0 : index
    %c0_7 = arith.constant 0 : index
    %c0_8 = arith.constant 0 : index
    %32 = vector.load %arg3[%c0_5, %c0_6, %c0_7, %c0_8] : memref<1x4x1x1xf32, #tpu.memory_space<vmem>>, vector<1x4x1x1xf32>
    %c0_9 = arith.constant 0 : index
    %c0_10 = arith.constant 0 : index
    %c0_11 = arith.constant 0 : index
    %c0_12 = arith.constant 0 : index
    %33 = vector.load %arg4[%c0_9, %c0_10, %c0_11, %c0_12] : memref<1x4x1x1xf32, #tpu.memory_space<vmem>>, vector<1x4x1x1xf32>
    %34 = vector.broadcast %31 : vector<1x1x2x128xf32> to vector<1x4x2x128xf32>
    %35 = arith.mulf %11, %34 : vector<1x4x2x128xf32>
    %36 = vector.broadcast %32 : vector<1x4x1x1xf32> to vector<1x4x2x128xf32>
    %37 = arith.mulf %35, %36 : vector<1x4x2x128xf32>
    %38 = vector.broadcast %33 : vector<1x4x1x1xf32> to vector<1x4x2x128xf32>
    %39 = arith.addf %37, %38 : vector<1x4x2x128xf32>
    %c0_13 = arith.constant 0 : index
    %c0_14 = arith.constant 0 : index
    %c0_15 = arith.constant 0 : index
    %c0_16 = arith.constant 0 : index
    %40 = vector.load %arg5[%c0_13, %c0_14, %c0_15, %c0_16] : memref<1x4x2x128xf32, #tpu.memory_space<vmem>>, vector<1x4x2x128xf32>
    tpu.vector_store %arg5[%c0_13, %c0_14, %c0_15, %c0_16], %39 {strides = array<i32>} : memref<1x4x2x128xf32, #tpu.memory_space<vmem>>, vector<1x4x2x128xf32>,
    return
  }
  func.func @transform_0(%arg0: i32, %arg1: i32) -> (i32, i32, i32, i32) {
    %c0_i32 = arith.constant 0 : i32
    %c0_i32_0 = arith.constant 0 : i32
    %c0_i32_1 = arith.constant 0 : i32
    return %arg0, %c0_i32, %arg1, %c0_i32_0 : i32, i32, i32, i32
  }
  func.func @transform_1(%arg0: i32, %arg1: i32) -> (i32, i32, i32, i32) {
    %c0_i32 = arith.constant 0 : i32
    %c0_i32_0 = arith.constant 0 : i32
    %c0_i32_1 = arith.constant 0 : i32
    %c0_i32_2 = arith.constant 0 : i32
    %c0_i32_3 = arith.constant 0 : i32
    return %c0_i32, %c0_i32_0, %c0_i32_1, %c0_i32_2 : i32, i32, i32, i32
  }
  func.func @transform_2(%arg0: i32, %arg1: i32) -> (i32, i32, i32, i32) {
    %c0_i32 = arith.constant 0 : i32
    %c0_i32_0 = arith.constant 0 : i32
    %c0_i32_1 = arith.constant 0 : i32
    %c0_i32_2 = arith.constant 0 : i32
    %c0_i32_3 = arith.constant 0 : i32
    return %c0_i32, %c0_i32_0, %c0_i32_1, %c0_i32_2 : i32, i32, i32, i32
  }
  func.func @transform_3(%arg0: i32, %arg1: i32) -> (i32, i32, i32, i32) {
    %c0_i32 = arith.constant 0 : i32
    %c0_i32_0 = arith.constant 0 : i32
    %c0_i32_1 = arith.constant 0 : i32
    return %arg0, %c0_i32, %arg1, %c0_i32_0 : i32, i32, i32, i32
  }
}

</mosaic_0001>

<llo_original>
// kernel: tpu_custom_call.1
$region0: #{tpu_custom_call.1}
  #allocation0 [shape = 'u32[]', space=smem, size = 0x4, offset = 0x4, fixed_abs, tag = 'smem constant byte address 0x4 - core index']
  #allocation1 [shape = 'u32[72,128]{1,0:T(1,128)}', space=vmem, size = 0x9000, scoped, tag = 'internal scratch']
  %s0 = inlined_call_operand.hbm [shape: f32[2,4,2,128], index: 0, kind: input, shape index: {}]
  %s1 = inlined_call_operand.vmem [shape: f32[1,4,1,1], index: 1, kind: input, shape index: {}]
  %s2 = inlined_call_operand.vmem [shape: f32[1,4,1,1], index: 2, kind: input, shape index: {}]
  %s3 = inlined_call_operand.hbm [shape: f32[2,4,2,128], index: 3, kind: output, shape index: {}]
  %s4 = sld [smem:[#allocation0]]
  $region49: #{tpu_custom_call.1} parent=0
    _
  %s6 = ssub.s32 1, %s4
  %s7 = scalar_select 0, %s6, %s4
  $region1: #{tpu_custom_call.1} parent=0
    #allocation2 [shape = 'u8[8192]{0}', space=vmem, size = 0x2000, scoped, tag = 'input window, operand 0']
    #allocation3 [shape = 's32[2]{0}', space=sflag, size = 0x8, scoped, tag = 'scoped memory for tpu_custom_call.1']
    #allocation4 [shape = 's32[2]{0}', space=sflag, size = 0x8, scoped, tag = 'scoped memory for tpu_custom_call.1']
    #allocation5 [shape = 'u8[8192]{0}', space=vmem, size = 0x2000, scoped, tag = 'output window, operand 0']
    %8 = vsyncpa [#allocation3], 0
    %s9 = scalar_lea.sflag [#allocation3], 1
    %10 = vsyncpa %s9, 0
    %11 = vsyncpa [#allocation4], 0
    %s12 = scalar_lea.sflag [#allocation4], 1
    %13 = vsyncpa %s12, 0
    loop: start=0, step=1, limit=4
    $region2: #{tpu_custom_call.1} parent=1 // loop_pre_header
      _
    $region3: #{tpu_custom_call.1} parent=1 // loop_header
      %s15 = sphi 0, %s19
      %p16 = scmp.ge.s32.totalorder %s15, 4
      %s22 = sphi 0, %s34
      %s23 = sphi 0, %s30
      %s24 = sphi 0, %s22
      %s25 = sphi 0, %s23
      %s26 = sphi 0, %s24
      %s27 = sphi 0, %s25
      %s39 = sphi 0, %s41
      %s42 = sphi 0, %s39
      %s43 = sphi 0, %s42
      %s59 = sphi 0, %s43
      %s63 = sphi 0, %s63
      %s65 = sphi 0, %s63
      %s66 = sphi 0, %s65
      %s80 = sphi 0, %s66
      %s84 = sphi 0, %s84
      %s86 = sphi 0, %s84
      %s87 = sphi 0, %s86
      %s101 = sphi 0, %s87
      %s109 = sphi 0, %s111
      %s112 = sphi 0, %s109
      %s113 = sphi 0, %s112
      %s129 = sphi 0, %s113
    $region4: #{tpu_custom_call.1} parent=1 // loop_header_branch
      %18 = sbr.rel (%p16) target = $region8
    $region5: #{tpu_custom_call.1} parent=1 // loop_body
      %s20 = ssub.s32 %s15, 1
      %s21 = ssub.s32 %s15, 2
      %s28 = sadd.s32 1, %s23
      %p29 = scmp.ge.s32.totalorder %s28, 1
      %s30 = scalar_select %p29, 0, %s28
      %s31 = sadd.s32 1, %s22
      %s32 = scalar_select %p29, %s31, %s22
      %p33 = scmp.ge.s32.totalorder %s32, 2
      %s34 = scalar_select %p33, 0, %s32
      %s35 = ssub.s32 %s22, %s34
      %s36 = ssub.s32 %s23, %s30
      %s37 = sor.u32 %s35, %s36
      %p38 = scmp.eq.s32.totalorder %s37, 0
      %s40 = sadd.s32 %s39, 1
      %s41 = scalar_select %p38, %s39, %s40
      %p44 = pneg %p38
      %p45 = scmp.eq.s32.totalorder %s15, 1
      %p46 = por %p44, %p45
      %p47 = scmp.ne.s32.totalorder %s39, %s42
      %p48 = scmp.eq.s32.totalorder %s15, 0
      %p49 = por %p47, %p48
      %p50 = scmp.ne.s32.totalorder %s39, %s42
      %p51 = scmp.eq.s32.totalorder %s20, 1
      %p52 = por %p50, %p51
      %p53 = scmp.ne.s32.totalorder %s42, %s43
      %p54 = scmp.eq.s32.totalorder %s20, 0
      %p55 = por %p53, %p54
      %p56 = scmp.ne.s32.totalorder %s42, %s43
      %p57 = scmp.eq.s32.totalorder %s21, 1
      %p58 = por %p56, %p57
      %p60 = scmp.ne.s32.totalorder %s43, %s59
      %p61 = scmp.eq.s32.totalorder %s21, 0
      %p62 = por %p60, %p61
      %s64 = sadd.s32 %s63, 1
      %p67 = scmp.eq.s32.totalorder %s15, 1
      %p68 = scmp.ne.s32.totalorder %s63, %s65
      %p69 = scmp.eq.s32.totalorder %s15, 0
      %p70 = por %p68, %p69
      %p71 = scmp.ne.s32.totalorder %s63, %s65
      %p72 = scmp.eq.s32.totalorder %s20, 1
      %p73 = por %p71, %p72
      %p74 = scmp.ne.s32.totalorder %s65, %s66
      %p75 = scmp.eq.s32.totalorder %s20, 0
      %p76 = por %p74, %p75
      %p77 = scmp.ne.s32.totalorder %s65, %s66
      %p78 = scmp.eq.s32.totalorder %s21, 1
      %p79 = por %p77, %p78
      %p81 = scmp.ne.s32.totalorder %s66, %s80
      %p82 = scmp.eq.s32.totalorder %s21, 0
      %p83 = por %p81, %p82
      %s85 = sadd.s32 %s84, 1
      %p88 = scmp.eq.s32.totalorder %s15, 1
      %p89 = scmp.ne.s32.totalorder %s84, %s86
      %p90 = scmp.eq.s32.totalorder %s15, 0
      %p91 = por %p89, %p90
      %p92 = scmp.ne.s32.totalorder %s84, %s86
      %p93 = scmp.eq.s32.totalorder %s20, 1
      %p94 = por %p92, %p93
      %p95 = scmp.ne.s32.totalorder %s86, %s87
      %p96 = scmp.eq.s32.totalorder %s20, 0
      %p97 = por %p95, %p96
      %p98 = scmp.ne.s32.totalorder %s86, %s87
      %p99 = scmp.eq.s32.totalorder %s21, 1
      %p100 = por %p98, %p99
      %p102 = scmp.ne.s32.totalorder %s87, %s101
      %p103 = scmp.eq.s32.totalorder %s21, 0
      %p104 = por %p102, %p103
      %s105 = ssub.s32 %s22, %s34
      %s106 = ssub.s32 %s23, %s30
      %s107 = sor.u32 %s105, %s106
      %p108 = scmp.eq.s32.totalorder %s107, 0
      %s110 = sadd.s32 %s109, 1
      %s111 = scalar_select %p108, %s109, %s110
      %p114 = pneg %p108
      %p115 = scmp.eq.s32.totalorder %s15, 1
      %p116 = por %p114, %p115
      %p117 = scmp.ne.s32.totalorder %s109, %s112
      %p118 = scmp.eq.s32.totalorder %s15, 0
      %p119 = por %p117, %p118
      %p120 = scmp.ne.s32.totalorder %s109, %s112
      %p121 = scmp.eq.s32.totalorder %s20, 1
      %p122 = por %p120, %p121
      %p123 = scmp.ne.s32.totalorder %s112, %s113
      %p124 = scmp.eq.s32.totalorder %s20, 0
      %p125 = por %p123, %p124
      %p126 = scmp.ne.s32.totalorder %s112, %s113
      %p127 = scmp.eq.s32.totalorder %s21, 1
      %p128 = por %p126, %p127
      %p130 = scmp.ne.s32.totalorder %s113, %s129
      %p131 = scmp.eq.s32.totalorder %s21, 0
      %p132 = por %p130, %p131
      %p133 = scmp.le.s32.totalorder 1, %s15
      %p134 = scmp.lt.s32.totalorder %s15, 3
      %p135 = pnand %p133, %p134
      %p136 = pneg %p135
      // Predicated region
      $region9: #{tpu_custom_call.1} parent=5 // pred_check
        _
      $region10: #{tpu_custom_call.1} parent=5 // pred_check_branch
        %138 = sbr.rel (%p135) target = $region12
      $region11: #{tpu_custom_call.1} parent=5 // pred_region
        %s139 = ssub.s32 %s15, 1
        // Predicated region
        $region13: #{tpu_custom_call.1} parent=11 // pred_check
          %p140 = pneg %p76
        $region14: #{tpu_custom_call.1} parent=11 // pred_check_branch
          %142 = sbr.rel (%p140) target = $region16
        $region15: #{tpu_custom_call.1} parent=11 // pred_region
          _
        $region16: #{tpu_custom_call.1} parent=11 // pred_fallthru
          _
        // Predicated region
        $region17: #{tpu_custom_call.1} parent=11 // pred_check
          %p143 = pneg %p97
        $region18: #{tpu_custom_call.1} parent=11 // pred_check_branch
          %145 = sbr.rel (%p143) target = $region20
        $region19: #{tpu_custom_call.1} parent=11 // pred_region
          _
        $region20: #{tpu_custom_call.1} parent=11 // pred_fallthru
          _
      $region12: #{tpu_custom_call.1} parent=5 // pred_fallthru
        _
      %p146 = scmp.lt.s32.totalorder %s15, 2
      // Predicated region
      $region21: #{tpu_custom_call.1} parent=5 // pred_check
        %p147 = pneg %p146
      $region22: #{tpu_custom_call.1} parent=5 // pred_check_branch
        %149 = sbr.rel (%p147) target = $region24
      $region23: #{tpu_custom_call.1} parent=5 // pred_region
        // Predicated region
        $region25: #{tpu_custom_call.1} parent=23 // pred_check
          %p150 = pneg %p49
        $region26: #{tpu_custom_call.1} parent=23 // pred_check_branch
          %152 = sbr.rel (%p150) target = $region28
        $region27: #{tpu_custom_call.1} parent=23 // pred_region
          %s153 = sand.u32 %s39, 1
          %s154 = scalar_lea.sflag [#allocation3], %s153
          %s155 = sand.u32 %s39, 1
          %s156 = smul.addr %s155, 8
          %s157 = scalar_lea.vmem [#allocation2], %s156
          %159 = vsyncadd %s154, 0
          %s160 = smul.addr %s22, 4
          %s161 = sadd.s32 %s23, %s160
          %s162 = smul.addr %s161, 2
          %s163 = scalar_lea.hbm %s0, %s162
          %s164 = sshll.u32 %s163, 4
          %s165 = int_to_ptr.hbm [resolvable:$true] %s164
          %s166 = sshll.u32 %s157, 4
          %s167 = int_to_ptr.vmem [resolvable:$true] %s166
          %172 = dma.hbm_to_vmem [thread:$0]  %s165, 128, %s167, %s154, 32, 32, 2
        $region28: #{tpu_custom_call.1} parent=23 // pred_fallthru
          _
      $region24: #{tpu_custom_call.1} parent=5 // pred_fallthru
        _
      %p173 = scmp.le.s32.totalorder 1, %s15
      %p174 = scmp.lt.s32.totalorder %s15, 3
      %p175 = pnand %p173, %p174
      %p176 = pneg %p175
      // Predicated region
      $region29: #{tpu_custom_call.1} parent=5 // pred_check
        _
      $region30: #{tpu_custom_call.1} parent=5 // pred_check_branch
        %178 = sbr.rel (%p175) target = $region32
      $region31: #{tpu_custom_call.1} parent=5 // pred_region
        %s179 = ssub.s32 %s15, 1
        %s180 = sand.u32 %s42, 1
        %s181 = scalar_lea.sflag [#allocation3], %s180
        %s182 = sand.u32 %s42, 1
        %s183 = smul.addr %s182, 8
        %s184 = scalar_lea.vmem [#allocation2], %s183
        // Predicated region
        $region33: #{tpu_custom_call.1} parent=31 // pred_check
          %p185 = pneg %p55
        $region34: #{tpu_custom_call.1} parent=31 // pred_check_branch
          %187 = sbr.rel (%p185) target = $region36
        $region35: #{tpu_custom_call.1} parent=31 // pred_region
          %189 = dma.done %s181, 128
        $region36: #{tpu_custom_call.1} parent=31 // pred_fallthru
          _
        %s190 = sand.u32 %s42, 1
        %s191 = scalar_lea.sflag [#allocation3], %s190
        %s192 = sand.u32 %s42, 1
        %s193 = smul.addr %s192, 8
        %s194 = scalar_lea.vmem [#allocation2], %s193
        %p195 = pneg %p55
        %p196 = pneg %p52
        %p197 = pneg %p76
        %p198 = pneg %p73
        %p199 = pneg %p97
        %p200 = pneg %p94
        %p201 = pneg %p125
        %p202 = pneg %p122
        %s203 = sand.u32 %s112, 1
        %s204 = scalar_lea.sflag [#allocation4], %s203
        %s205 = sand.u32 %s112, 1
        %s206 = smul.addr %s205, 8
        %s207 = scalar_lea.vmem [#allocation5], %s206
        %v208 = vld [vmem:[%s184] sm:$0x3]
        %v209 = vld [vmem:[%s184 + $0x2] sm:$0x3]
        %v210 = vld [vmem:[%s184 + $0x4] sm:$0x3]
        %v211 = vld [vmem:[%s184 + $0x6] sm:$0x3]
        %v212 = vadd.f32 %v208, %v209
        %v213 = vadd.f32 %v212, %v210
        %v214 = vadd.f32 %v213, %v211
        %v215 = vmul.f32 %v214, 0.25
        %v216 = vsub.f32 %v208, %v215
        %v217 = vsub.f32 %v209, %v215
        %v218 = vsub.f32 %v210, %v215
        %v219 = vsub.f32 %v211, %v215
        %v220 = vmul.f32 %v216, %v216
        %v221 = vmul.f32 %v217, %v217
        %v222 = vadd.f32 %v220, %v221
        %v223 = vmul.f32 %v218, %v218
        %v224 = vadd.f32 %v222, %v223
        %v225 = vmul.f32 %v219, %v219
        %v226 = vadd.f32 %v224, %v225
        %v227 = vmul.f32 %v226, 0.25
        %v228 = vadd.f32 %v227, 1e-05
        %v229 = vrsqrt.pop %v228
        %v230 = vmul.f32 %v229, %v228
        %v231 = vmul.f32 %v230, %v229
        %v232 = vmul.f32 0.5, %v231
        %v233 = vsub.f32 1.5, %v232
        %v234 = vmul.f32 %v229, %v233
        %vm235 = vweird.f32 %v228
        %vm236 = vweird.f32 %v229
        %vm237 = vmor %vm235, %vm236
        %v238 = vsel %vm237, %v229, %v234
        %v239 = vld [vmem:[%s1] sm:$0x1]
        %v240 = vld [vmem:[%s1 + $0x1] sm:$0x1]
        %v241 = vld [vmem:[%s1 + $0x2] sm:$0x1]
        %v242 = vld [vmem:[%s1 + $0x3] sm:$0x1]
        %v243 = vld [vmem:[%s2] sm:$0x1]
        %v244 = vld [vmem:[%s2 + $0x1] sm:$0x1]
        %v245 = vld [vmem:[%s2 + $0x2] sm:$0x1]
        %v246 = vld [vmem:[%s2 + $0x3] sm:$0x1]
        %v247 = vmul.f32 %v216, %v238
        %v248 = vmul.f32 %v217, %v238
        %v249 = vmul.f32 %v218, %v238
        %v250 = vmul.f32 %v219, %v238
        %v255 = vperm.slane %v239, 0
        %v256 = vperm.slane %v240, 0
        %v257 = vperm.slane %v241, 0
        %v258 = vperm.slane %v242, 0
        %259 = vset.pattern.permute.xlu0 0
        %260 = vperm.xlu0 %259, %v255
        %v261 = vpop.permute.xlu0 %260
        %263 = vset.pattern.permute.xlu0 0
        %264 = vperm.xlu0 %263, %v256
        %v265 = vpop.permute.xlu0 %264
        %267 = vset.pattern.permute.xlu0 0
        %268 = vperm.xlu0 %267, %v257
        %v269 = vpop.permute.xlu0 %268
        %271 = vset.pattern.permute.xlu0 0
        %272 = vperm.xlu0 %271, %v258
        %v273 = vpop.permute.xlu0 %272
        %v275 = vmul.f32 %v247, %v261
        %v276 = vmul.f32 %v248, %v265
        %v277 = vmul.f32 %v249, %v269
        %v278 = vmul.f32 %v250, %v273
        %v283 = vperm.slane %v243, 0
        %v284 = vperm.slane %v244, 0
        %v285 = vperm.slane %v245, 0
        %v286 = vperm.slane %v246, 0
        %287 = vset.pattern.permute.xlu0 0
        %288 = vperm.xlu0 %287, %v283
        %v289 = vpop.permute.xlu0 %288
        %291 = vset.pattern.permute.xlu0 0
        %292 = vperm.xlu0 %291, %v284
        %v293 = vpop.permute.xlu0 %292
        %295 = vset.pattern.permute.xlu0 0
        %296 = vperm.xlu0 %295, %v285
        %v297 = vpop.permute.xlu0 %296
        %299 = vset.pattern.permute.xlu0 0
        %300 = vperm.xlu0 %299, %v286
        %v301 = vpop.permute.xlu0 %300
        %v303 = vadd.f32 %v275, %v289
        %v304 = vadd.f32 %v276, %v293
        %v305 = vadd.f32 %v277, %v297
        %v306 = vadd.f32 %v278, %v301
        %307 = vst [vmem:[%s207] sm:$0x3] %v303
        %308 = vst [vmem:[%s207 + $0x2] sm:$0x3] %v304
        %309 = vst [vmem:[%s207 + $0x4] sm:$0x3] %v305
        %310 = vst [vmem:[%s207 + $0x6] sm:$0x3] %v306
        %s311 = sand.u32 %s112, 1
        %s312 = scalar_lea.sflag [#allocation4], %s311
        %s313 = sand.u32 %s112, 1
        %s314 = smul.addr %s313, 8
        %s315 = scalar_lea.vmem [#allocation5], %s314
        // Predicated region
        $region37: #{tpu_custom_call.1} parent=31 // pred_check
          %p316 = pneg %p122
        $region38: #{tpu_custom_call.1} parent=31 // pred_check_branch
          %318 = sbr.rel (%p316) target = $region40
        $region39: #{tpu_custom_call.1} parent=31 // pred_region
          %320 = vsyncadd %s312, 0
          %s321 = smul.addr %s24, 4
          %s322 = sadd.s32 %s25, %s321
          %s323 = smul.addr %s322, 2
          %s324 = scalar_lea.hbm %s3, %s323
          %s325 = sshll.u32 %s315, 4
          %s326 = int_to_ptr.vmem [resolvable:$true] %s325
          %s327 = sshll.u32 %s324, 4
          %s328 = int_to_ptr.hbm [resolvable:$true] %s327
          %333 = dma.vmem_to_hbm [thread:$0]  %s326, 128, %s328, %s312, 32, 32, 2
        $region40: #{tpu_custom_call.1} parent=31 // pred_fallthru
          _
      $region32: #{tpu_custom_call.1} parent=5 // pred_fallthru
        _
      %p334 = scmp.le.s32.totalorder 2, %s15
      // Predicated region
      $region41: #{tpu_custom_call.1} parent=5 // pred_check
        %p335 = pneg %p334
      $region42: #{tpu_custom_call.1} parent=5 // pred_check_branch
        %337 = sbr.rel (%p335) target = $region44
      $region43: #{tpu_custom_call.1} parent=5 // pred_region
        %s338 = ssub.s32 %s15, 2
        // Predicated region
        $region45: #{tpu_custom_call.1} parent=43 // pred_check
          %p339 = pneg %p128
        $region46: #{tpu_custom_call.1} parent=43 // pred_check_branch
          %341 = sbr.rel (%p339) target = $region48
        $region47: #{tpu_custom_call.1} parent=43 // pred_region
          %s342 = sand.u32 %s113, 1
          %s343 = scalar_lea.sflag [#allocation4], %s342
          %s344 = sand.u32 %s113, 1
          %s345 = smul.addr %s344, 8
          %s346 = scalar_lea.vmem [#allocation5], %s345
          %348 = dma.done %s343, 128
        $region48: #{tpu_custom_call.1} parent=43 // pred_fallthru
          _
      $region44: #{tpu_custom_call.1} parent=5 // pred_fallthru
        _
    $region6: #{tpu_custom_call.1} parent=1 // loop_footer
      %s19 = sadd.s32 1, %s15
    $region7: #{tpu_custom_call.1} parent=1 // loop_footer_branch
      %14 = sbr.rel target = $region3
    $region8: #{tpu_custom_call.1} parent=1 // loop_exit
      _
    %349 = vsyncpa [#allocation3], 1
    %s350 = scalar_lea.sflag [#allocation3], 1
    %351 = vsyncpa %s350, 1
    %352 = vsyncpa [#allocation4], 1
    %s353 = scalar_lea.sflag [#allocation4], 1
    %354 = vsyncpa %s353, 1

</llo_original>
